<compile_context>
chip_gen: v5e
topology: v5e:2x2
jax: 0.10.0
libtpu: 0.0.40
codegen_flags: <defaults>
</compile_context>

<pallas_src>
import jax
import jax.numpy as jnp
from jax import lax
from jax.experimental import pallas as pl
from jax.experimental.pallas import tpu as pltpu

LN_EPS = 1e-5
# Below this contraction size the first Linear runs on the VPU as a broadcast
# multiply-add instead of wasting an MXU pass (K would be padded to 128/256).
_VPU_FIRST_LINEAR_MAX_K = 8


def _round_up(n, m):
    return ((n + m - 1) // m) * m


def _layernorm(x, gamma, beta):
    # x: (tm, F) f32; gamma/beta: (1, F). Normalize over last axis (nn.LayerNorm(F)).
    mu = jnp.mean(x, axis=-1, keepdims=True)
    xc = x - mu
    var = jnp.mean(xc * xc, axis=-1, keepdims=True)
    inv = lax.rsqrt(var + LN_EPS)
    return xc * inv * gamma + beta


def _gelu(x):
    # Exact (erf-based) GELU, matching torch.nn.GELU() default.
    # (tanh approximation would move work to the EUP on v5e, but changes values
    #  vs. the PyTorch reference, so we keep erf.)
    return 0.5 * x * (1.0 + lax.erf(x * 0.7071067811865476))


def _make_kernel(f_in, matmul_dtype):
    use_vpu_first = f_in <= _VPU_FIRST_LINEAR_MAX_K

    def kernel(x_ref,
               w1_ref, b1_ref, g1_ref, bt1_ref,
               w2_ref, b2_ref, g2_ref, bt2_ref,
               o_ref):
        b1 = b1_ref[...].astype(jnp.float32)

        # ---- linear1 ----
        if use_vpu_first:
            # Tiny-K linear as a VPU broadcast multiply-add (skips the MXU).
            x = x_ref[...].astype(jnp.float32)            # (tm, f_in)
            w1 = w1_ref[...].astype(jnp.float32)          # (f_in, f_out)
            acc = x[:, 0:1] * w1[0:1, :]
            for k in range(1, f_in):
                acc = acc + x[:, k:k + 1] * w1[k:k + 1, :]
            h = acc + b1
        else:
            h = jnp.dot(x_ref[...].astype(matmul_dtype),
                        w1_ref[...].astype(matmul_dtype),
                        preferred_element_type=jnp.float32) + b1

        # ---- norm1 + gelu (+ dropout == identity in eval mode) ----
        h = _gelu(_layernorm(h,
                             g1_ref[...].astype(jnp.float32),
                             bt1_ref[...].astype(jnp.float32)))

        # ---- linear2 (MXU; f32 accumulation) ----
        h = jnp.dot(h.astype(matmul_dtype), w2_ref[...].astype(matmul_dtype),
                    preferred_element_type=jnp.float32) \
            + b2_ref[...].astype(jnp.float32)

        # ---- norm2 + gelu (+ dropout == identity in eval mode) ----
        h = _gelu(_layernorm(h,
                             g2_ref[...].astype(jnp.float32),
                             bt2_ref[...].astype(jnp.float32)))

        o_ref[...] = h.astype(o_ref.dtype)

    return kernel


def dense_block(x, params, *, tm=None, mxu_dtype=None):
    """x: (..., F_in) -> (..., F_out). All compute fused in one Pallas kernel.

    mxu_dtype: optional dtype (e.g. jnp.bfloat16) for the MXU matmul operands
    (fast path on v6e/v7x); accumulation stays f32. None keeps matmuls in f32.
    """
    w1, b1, g1, bt1, w2, b2, g2, bt2 = params
    f_in = x.shape[-1]
    f_out = w1.shape[1]
    lead = x.shape[:-1]

    matmul_dtype = jnp.dtype(mxu_dtype) if mxu_dtype is not None else jnp.float32
    use_vpu_first = f_in <= _VPU_FIRST_LINEAR_MAX_K
    # Pre-cast weights once in the wrapper so the kernel doesn't re-cast per tile.
    if mxu_dtype is not None:
        w2 = w2.astype(matmul_dtype)
        if not use_vpu_first:
            w1 = w1.astype(matmul_dtype)

    x2d = x.reshape(-1, f_in)
    M = x2d.shape[0]

    # Large row tile: amortizes per-grid-step overhead and fills the MXU /
    # pipeline.  Capped at 512 rows (256 KiB f32 activations at f_out=128),
    # rounded to a multiple of 8 sublanes.
    if tm is None:
        tm = min(512, _round_up(M, 8))
    tm = _round_up(tm, 8)

    M_pad = _round_up(M, tm)
    if M_pad != M:
        x2d = jnp.pad(x2d, ((0, M_pad - M), (0, 0)))

    # 2-D (1, F) views for the per-feature parameter vectors.
    b1r, g1r, bt1r = b1.reshape(1, f_out), g1.reshape(1, f_out), bt1.reshape(1, f_out)
    b2r, g2r, bt2r = b2.reshape(1, f_out), g2.reshape(1, f_out), bt2.reshape(1, f_out)

    # Constant index_map -> fetched once, VMEM resident across the grid.
    resident = lambda shape: pl.BlockSpec(shape, lambda i: (0, 0))

    out = pl.pallas_call(
        _make_kernel(f_in, matmul_dtype),
        out_shape=jax.ShapeDtypeStruct((M_pad, f_out), x.dtype),
        grid_spec=pltpu.PrefetchScalarGridSpec(
            num_scalar_prefetch=0,
            grid=(M_pad // tm,),
            in_specs=[
                # TODO(synk): for f_in == 1 the (tm, 1) x block is lane-sparse on
                # the input DMA path; negligible at these sizes.
                pl.BlockSpec((tm, f_in), lambda i: (i, 0)),   # x rows (streamed)
                resident((f_in, f_out)),                      # w1
                resident((1, f_out)),                         # b1
                resident((1, f_out)),                         # gamma1
                resident((1, f_out)),                         # beta1
                resident((f_out, f_out)),                     # w2
                resident((1, f_out)),                         # b2
                resident((1, f_out)),                         # gamma2
                resident((1, f_out)),                         # beta2
            ],
            out_specs=pl.BlockSpec((tm, f_out), lambda i: (i, 0)),
        ),
        compiler_params=pltpu.CompilerParams(
            dimension_semantics=("parallel",),        # megacore / 2-TC sharding
            vmem_limit_bytes=32 * 1024 * 1024,        # explicit, safe on v5e/v6e/v7x
        ),
    )(x2d, w1, b1r, g1r, bt1r, w2, b2r, g2r, bt2r)

    if M_pad != M:
        out = out[:M]
    return out.reshape(*lead, f_out)


def init_params(key, input_features=1, output_features=128, dtype=jnp.float32):
    """Deterministic synthetic init (uniform like PyTorch Linear; LN gamma=1, beta=0)."""
    k1, k2, k3, k4 = jax.random.split(key, 4)
    bound1 = 1.0 / jnp.sqrt(jnp.maximum(input_features, 1)).astype(jnp.float32)
    bound2 = 1.0 / jnp.sqrt(jnp.float32(output_features))
    w1 = jax.random.uniform(k1, (input_features, output_features), dtype, -bound1, bound1)
    b1 = jax.random.uniform(k2, (output_features,), dtype, -bound1, bound1)
    w2 = jax.random.uniform(k3, (output_features, output_features), dtype, -bound2, bound2)
    b2 = jax.random.uniform(k4, (output_features,), dtype, -bound2, bound2)
    g1 = jnp.ones((output_features,), dtype)
    bt1 = jnp.zeros((output_features,), dtype)
    g2 = jnp.ones((output_features,), dtype)
    bt2 = jnp.zeros((output_features,), dtype)
    return (w1, b1, g1, bt1, w2, b2, g2, bt2)


def dense_block_ref(x, params):
    """Pure-JAX reference of the PyTorch forward (eval mode)."""
    w1, b1, g1, bt1, w2, b2, g2, bt2 = params

    def ln(h, g, b):
        mu = jnp.mean(h, axis=-1, keepdims=True)
        var = jnp.mean((h - mu) ** 2, axis=-1, keepdims=True)
        return (h - mu) / jnp.sqrt(var + LN_EPS) * g + b

    gelu = lambda h: 0.5 * h * (1.0 + lax.erf(h / jnp.sqrt(2.0)))
    h = x @ w1 + b1
    h = gelu(ln(h, g1, bt1))
    h = h @ w2 + b2
    h = gelu(ln(h, g2, bt2))
    return h


if __name__ == "__main__":
    key = jax.random.PRNGKey(0)
    kx, kp = jax.random.split(key)

    B, S, F_IN, F_OUT = 2, 8, 1, 128          # small shapes consistent with the module
    x = jax.random.normal(kx, (B, S, F_IN), jnp.float32)
    params = init_params(kp, F_IN, F_OUT)
    ref = dense_block_ref(x, params)

    # f32 matmul path (tight parity with the reference).
    out = jax.block_until_ready(dense_block(x, params))
    assert out.shape == (B, S, F_OUT)
    assert jnp.allclose(out, ref, atol=1e-5, rtol=1e-5)

    # bf16-into-MXU path (fast path on v6e/v7x); f32 accumulation, looser tolerance.
    out_bf16 = jax.block_until_ready(dense_block(x, params, mxu_dtype=jnp.bfloat16))
    assert jnp.allclose(out_bf16, ref, atol=5e-2, rtol=5e-2)

    # Row count not divisible by the tile: exercises padding + multi-step grid.
    x2 = jax.random.normal(kx, (2, 300, F_IN), jnp.float32)
    out2 = jax.block_until_ready(dense_block(x2, params, tm=256))
    assert jnp.allclose(out2, dense_block_ref(x2, params), atol=1e-5, rtol=1e-5)

    print("KERNEL_OK")
</pallas_src>

<mosaic_0001>
module attributes {stable_mosaic.version = 11 : i64} {
  func.func @kernel(%arg0: i32, %arg1: memref<16x1xf32, #tpu.memory_space<vmem>>, %arg2: memref<1x128xf32, #tpu.memory_space<vmem>>, %arg3: memref<1x128xf32, #tpu.memory_space<vmem>>, %arg4: memref<1x128xf32, #tpu.memory_space<vmem>>, %arg5: memref<1x128xf32, #tpu.memory_space<vmem>>, %arg6: memref<128x128xf32, #tpu.memory_space<vmem>>, %arg7: memref<1x128xf32, #tpu.memory_space<vmem>>, %arg8: memref<1x128xf32, #tpu.memory_space<vmem>>, %arg9: memref<1x128xf32, #tpu.memory_space<vmem>>, %arg10: memref<16x128xf32, #tpu.memory_space<vmem>>) attributes {dimension_semantics = [#tpu.dimension_semantics<parallel>], iteration_bounds = array<i64: 1>, scalar_prefetch = 0 : i64, scratch_operands = 0 : i64, tpu.core_type = #tpu.core_type<tc>, window_params = [{transform_indices = @transform_0, window_bounds = array<i64: 16, 1>}, {pipeline_mode = #tpu.pipeline_mode<synchronous>, transform_indices = @transform_1, window_bounds = array<i64: 1, 128>}, {pipeline_mode = #tpu.pipeline_mode<synchronous>, transform_indices = @transform_2, window_bounds = array<i64: 1, 128>}, {pipeline_mode = #tpu.pipeline_mode<synchronous>, transform_indices = @transform_3, window_bounds = array<i64: 1, 128>}, {pipeline_mode = #tpu.pipeline_mode<synchronous>, transform_indices = @transform_4, window_bounds = array<i64: 1, 128>}, {pipeline_mode = #tpu.pipeline_mode<synchronous>, transform_indices = @transform_5, window_bounds = array<i64: 128, 128>}, {pipeline_mode = #tpu.pipeline_mode<synchronous>, transform_indices = @transform_6, window_bounds = array<i64: 1, 128>}, {pipeline_mode = #tpu.pipeline_mode<synchronous>, transform_indices = @transform_7, window_bounds = array<i64: 1, 128>}, {pipeline_mode = #tpu.pipeline_mode<synchronous>, transform_indices = @transform_8, window_bounds = array<i64: 1, 128>}, {transform_indices = @transform_9, window_bounds = array<i64: 16, 128>}]} {
    %c0 = arith.constant 0 : index
    %c0_0 = arith.constant 0 : index
    %0 = vector.load %arg3[%c0, %c0_0] : memref<1x128xf32, #tpu.memory_space<vmem>>, vector<1x128xf32>
    %c0_1 = arith.constant 0 : index
    %c0_2 = arith.constant 0 : index
    %1 = vector.load %arg1[%c0_1, %c0_2] : memref<16x1xf32, #tpu.memory_space<vmem>>, vector<16x1xf32>
    %c0_3 = arith.constant 0 : index
    %c0_4 = arith.constant 0 : index
    %2 = vector.load %arg2[%c0_3, %c0_4] : memref<1x128xf32, #tpu.memory_space<vmem>>, vector<1x128xf32>
    %3 = vector.broadcast %1 : vector<16x1xf32> to vector<16x128xf32>
    %4 = vector.broadcast %2 : vector<1x128xf32> to vector<16x128xf32>
    %5 = arith.mulf %3, %4 : vector<16x128xf32>
    %6 = vector.broadcast %0 : vector<1x128xf32> to vector<16x128xf32>
    %7 = arith.addf %5, %6 : vector<16x128xf32>
    %c0_5 = arith.constant 0 : index
    %c0_6 = arith.constant 0 : index
    %8 = vector.load %arg4[%c0_5, %c0_6] : memref<1x128xf32, #tpu.memory_space<vmem>>, vector<1x128xf32>
    %c0_7 = arith.constant 0 : index
    %c0_8 = arith.constant 0 : index
    %9 = vector.load %arg5[%c0_7, %c0_8] : memref<1x128xf32, #tpu.memory_space<vmem>>, vector<1x128xf32>
    %cst = arith.constant dense<0.000000e+00> : vector<16xf32>
    %10 = vector.multi_reduction <add>, %7, %cst [1] : vector<16x128xf32> to vector<16xf32>
    %11 = vector.shape_cast %10 : vector<16xf32> to vector<16x1xf32>
    %cst_9 = arith.constant 1.280000e+02 : f32
    %12 = vector.broadcast %cst_9 : f32 to vector<16x1xf32>
    %13 = arith.divf %11, %12 : vector<16x1xf32>
    %14 = vector.broadcast %13 : vector<16x1xf32> to vector<16x128xf32>
    %15 = arith.subf %7, %14 : vector<16x128xf32>
    %16 = arith.mulf %15, %15 : vector<16x128xf32>
    %cst_10 = arith.constant dense<0.000000e+00> : vector<16xf32>
    %17 = vector.multi_reduction <add>, %16, %cst_10 [1] : vector<16x128xf32> to vector<16xf32>
    %18 = vector.shape_cast %17 : vector<16xf32> to vector<16x1xf32>
    %cst_11 = arith.constant 1.280000e+02 : f32
    %19 = vector.broadcast %cst_11 : f32 to vector<16x1xf32>
    %20 = arith.divf %18, %19 : vector<16x1xf32>
    %cst_12 = arith.constant 9.99999974E-6 : f32
    %21 = vector.broadcast %cst_12 : f32 to vector<16x1xf32>
    %22 = arith.addf %20, %21 : vector<16x1xf32>
    %23 = math.rsqrt %22 : vector<16x1xf32>
    %24 = vector.broadcast %23 : vector<16x1xf32> to vector<16x128xf32>
    %25 = arith.mulf %15, %24 : vector<16x128xf32>
    %26 = vector.broadcast %8 : vector<1x128xf32> to vector<16x128xf32>
    %27 = arith.mulf %25, %26 : vector<16x128xf32>
    %28 = vector.broadcast %9 : vector<1x128xf32> to vector<16x128xf32>
    %29 = arith.addf %27, %28 : vector<16x128xf32>
    %cst_13 = arith.constant 5.000000e-01 : f32
    %30 = vector.broadcast %cst_13 : f32 to vector<16x128xf32>
    %31 = arith.mulf %30, %29 : vector<16x128xf32>
    %cst_14 = arith.constant 0.707106769 : f32
    %32 = vector.broadcast %cst_14 : f32 to vector<16x128xf32>
    %33 = arith.mulf %29, %32 : vector<16x128xf32>
    %34 = math.erf %33 : vector<16x128xf32>
    %cst_15 = arith.constant 1.000000e+00 : f32
    %35 = vector.broadcast %cst_15 : f32 to vector<16x128xf32>
    %36 = arith.addf %35, %34 : vector<16x128xf32>
    %37 = arith.mulf %31, %36 : vector<16x128xf32>
    %c0_16 = arith.constant 0 : index
    %c0_17 = arith.constant 0 : index
    %38 = vector.load %arg6[%c0_16, %c0_17] : memref<128x128xf32, #tpu.memory_space<vmem>>, vector<128x128xf32>
    %cst_18 = arith.constant dense<0.000000e+00> : vector<16x128xf32>
    %39 = tpu.matmul %37, %38, %cst_18 {dimension_numbers = #tpu.dot_dimension_numbers<[1], [0], [0], [1], [0, 0, 1, 1], [], []>} : vector<16x128xf32>, vector<128x128xf32>, vector<16x128xf32> -> vector<16x128xf32>
    %c0_19 = arith.constant 0 : index
    %c0_20 = arith.constant 0 : index
    %40 = vector.load %arg7[%c0_19, %c0_20] : memref<1x128xf32, #tpu.memory_space<vmem>>, vector<1x128xf32>
    %41 = vector.broadcast %40 : vector<1x128xf32> to vector<16x128xf32>
    %42 = arith.addf %39, %41 : vector<16x128xf32>
    %c0_21 = arith.constant 0 : index
    %c0_22 = arith.constant 0 : index
    %43 = vector.load %arg8[%c0_21, %c0_22] : memref<1x128xf32, #tpu.memory_space<vmem>>, vector<1x128xf32>
    %c0_23 = arith.constant 0 : index
    %c0_24 = arith.constant 0 : index
    %44 = vector.load %arg9[%c0_23, %c0_24] : memref<1x128xf32, #tpu.memory_space<vmem>>, vector<1x128xf32>
    %cst_25 = arith.constant dense<0.000000e+00> : vector<16xf32>
    %45 = vector.multi_reduction <add>, %42, %cst_25 [1] : vector<16x128xf32> to vector<16xf32>
    %46 = vector.shape_cast %45 : vector<16xf32> to vector<16x1xf32>
    %cst_26 = arith.constant 1.280000e+02 : f32
    %47 = vector.broadcast %cst_26 : f32 to vector<16x1xf32>
    %48 = arith.divf %46, %47 : vector<16x1xf32>
    %49 = vector.broadcast %48 : vector<16x1xf32> to vector<16x128xf32>
    %50 = arith.subf %42, %49 : vector<16x128xf32>
    %51 = arith.mulf %50, %50 : vector<16x128xf32>
    %cst_27 = arith.constant dense<0.000000e+00> : vector<16xf32>
    %52 = vector.multi_reduction <add>, %51, %cst_27 [1] : vector<16x128xf32> to vector<16xf32>
    %53 = vector.shape_cast %52 : vector<16xf32> to vector<16x1xf32>
    %cst_28 = arith.constant 1.280000e+02 : f32
    %54 = vector.broadcast %cst_28 : f32 to vector<16x1xf32>
    %55 = arith.divf %53, %54 : vector<16x1xf32>
    %cst_29 = arith.constant 9.99999974E-6 : f32
    %56 = vector.broadcast %cst_29 : f32 to vector<16x1xf32>
    %57 = arith.addf %55, %56 : vector<16x1xf32>
    %58 = math.rsqrt %57 : vector<16x1xf32>
    %59 = vector.broadcast %58 : vector<16x1xf32> to vector<16x128xf32>
    %60 = arith.mulf %50, %59 : vector<16x128xf32>
    %61 = vector.broadcast %43 : vector<1x128xf32> to vector<16x128xf32>
    %62 = arith.mulf %60, %61 : vector<16x128xf32>
    %63 = vector.broadcast %44 : vector<1x128xf32> to vector<16x128xf32>
    %64 = arith.addf %62, %63 : vector<16x128xf32>
    %cst_30 = arith.constant 5.000000e-01 : f32
    %65 = vector.broadcast %cst_30 : f32 to vector<16x128xf32>
    %66 = arith.mulf %65, %64 : vector<16x128xf32>
    %cst_31 = arith.constant 0.707106769 : f32
    %67 = vector.broadcast %cst_31 : f32 to vector<16x128xf32>
    %68 = arith.mulf %64, %67 : vector<16x128xf32>
    %69 = math.erf %68 : vector<16x128xf32>
    %cst_32 = arith.constant 1.000000e+00 : f32
    %70 = vector.broadcast %cst_32 : f32 to vector<16x128xf32>
    %71 = arith.addf %70, %69 : vector<16x128xf32>
    %72 = arith.mulf %66, %71 : vector<16x128xf32>
    %c0_33 = arith.constant 0 : index
    %c0_34 = arith.constant 0 : index
    %73 = vector.load %arg10[%c0_33, %c0_34] : memref<16x128xf32, #tpu.memory_space<vmem>>, vector<16x128xf32>
    tpu.vector_store %arg10[%c0_33, %c0_34], %72 {strides = array<i32>} : memref<16x128xf32, #tpu.memory_space<vmem>>, vector<16x128xf32>,
    return
  }
  func.func @transform_0(%arg0: i32) -> (i32, i32) {
    %c0_i32 = arith.constant 0 : i32
    %c0_i32_0 = arith.constant 0 : i32
    return %arg0, %c0_i32 : i32, i32
  }
  func.func @transform_1(%arg0: i32) -> (i32, i32) {
    %c0_i32 = arith.constant 0 : i32
    %c0_i32_0 = arith.constant 0 : i32
    %c0_i32_1 = arith.constant 0 : i32
    return %c0_i32, %c0_i32_0 : i32, i32
  }
  func.func @transform_2(%arg0: i32) -> (i32, i32) {
    %c0_i32 = arith.constant 0 : i32
    %c0_i32_0 = arith.constant 0 : i32
    %c0_i32_1 = arith.constant 0 : i32
    return %c0_i32, %c0_i32_0 : i32, i32
  }
  func.func @transform_3(%arg0: i32) -> (i32, i32) {
    %c0_i32 = arith.constant 0 : i32
    %c0_i32_0 = arith.constant 0 : i32
    %c0_i32_1 = arith.constant 0 : i32
    return %c0_i32, %c0_i32_0 : i32, i32
  }
  func.func @transform_4(%arg0: i32) -> (i32, i32) {
    %c0_i32 = arith.constant 0 : i32
    %c0_i32_0 = arith.constant 0 : i32
    %c0_i32_1 = arith.constant 0 : i32
    return %c0_i32, %c0_i32_0 : i32, i32
  }
  func.func @transform_5(%arg0: i32) -> (i32, i32) {
    %c0_i32 = arith.constant 0 : i32
    %c0_i32_0 = arith.constant 0 : i32
    %c0_i32_1 = arith.constant 0 : i32
    return %c0_i32, %c0_i32_0 : i32, i32
  }
  func.func @transform_6(%arg0: i32) -> (i32, i32) {
    %c0_i32 = arith.constant 0 : i32
    %c0_i32_0 = arith.constant 0 : i32
    %c0_i32_1 = arith.constant 0 : i32
    return %c0_i32, %c0_i32_0 : i32, i32
  }
  func.func @transform_7(%arg0: i32) -> (i32, i32) {
    %c0_i32 = arith.constant 0 : i32
    %c0_i32_0 = arith.constant 0 : i32
    %c0_i32_1 = arith.constant 0 : i32
    return %c0_i32, %c0_i32_0 : i32, i32
  }
  func.func @transform_8(%arg0: i32) -> (i32, i32) {
    %c0_i32 = arith.constant 0 : i32
    %c0_i32_0 = arith.constant 0 : i32
    %c0_i32_1 = arith.constant 0 : i32
    return %c0_i32, %c0_i32_0 : i32, i32
  }
  func.func @transform_9(%arg0: i32) -> (i32, i32) {
    %c0_i32 = arith.constant 0 : i32
    %c0_i32_0 = arith.constant 0 : i32
    return %arg0, %c0_i32 : i32, i32
  }
}

</mosaic_0001>

<llo_original>
// kernel: tpu_custom_call.1
$region0: #{tpu_custom_call.1}
  #allocation0 [shape = 'u32[]', space=smem, size = 0x4, offset = 0x4, fixed_abs, tag = 'smem constant byte address 0x4 - core index']
  #allocation1 [shape = 'u32[72,128]{1,0:T(1,128)}', space=vmem, size = 0x9000, scoped, tag = 'internal scratch']
  %s0 = inlined_call_operand.vmem [shape: f32[16,1], index: 0, kind: input, shape index: {}]
  %s1 = inlined_call_operand.vmem [shape: f32[1,128], index: 1, kind: input, shape index: {}]
  %s2 = inlined_call_operand.vmem [shape: f32[1,128], index: 2, kind: input, shape index: {}]
  %s3 = inlined_call_operand.vmem [shape: f32[1,128], index: 3, kind: input, shape index: {}]
  %s4 = inlined_call_operand.vmem [shape: f32[1,128], index: 4, kind: input, shape index: {}]
  %s5 = inlined_call_operand.hbm [shape: f32[128,128], index: 5, kind: input, shape index: {}]
  %s6 = inlined_call_operand.vmem [shape: f32[1,128], index: 6, kind: input, shape index: {}]
  %s7 = inlined_call_operand.vmem [shape: f32[1,128], index: 7, kind: input, shape index: {}]
  %s8 = inlined_call_operand.vmem [shape: f32[1,128], index: 8, kind: input, shape index: {}]
  %s9 = inlined_call_operand.hbm [shape: f32[16,128], index: 9, kind: output, shape index: {}]
  %s10 = sld [smem:[#allocation0]]
  $region50: #{tpu_custom_call.1} parent=0
    _
  %s12 = ssub.s32 1, %s10
  %s13 = scalar_select 0, %s12, %s10
  $region1: #{tpu_custom_call.1} parent=0
    #allocation2 [shape = 'u8[65536]{0}', space=vmem, size = 0x10000, scoped, tag = 'input window, operand 5, single buffered']
    #allocation3 [shape = 's32[1]{0}', space=sflag, size = 0x4, scoped, tag = 'scoped memory for tpu_custom_call.1']
    #allocation4 [shape = 's32[1]{0}', space=sflag, size = 0x4, scoped, tag = 'scoped memory for tpu_custom_call.1']
    #allocation5 [shape = 'u8[8192]{0}', space=vmem, size = 0x2000, scoped, tag = 'output window, operand 0, single buffered']
    %14 = vsyncpa [#allocation3], 0
    %15 = vsyncpa [#allocation4], 0
    // Predicated region
    $region2: #{tpu_custom_call.1} parent=1 // pred_check
      _
    $region3: #{tpu_custom_call.1} parent=1 // pred_check_branch
      %17 = sbr.rel (0) target = $region5
    $region4: #{tpu_custom_call.1} parent=1 // pred_region
      _
    $region5: #{tpu_custom_call.1} parent=1 // pred_fallthru
      _
    // Predicated region
    $region6: #{tpu_custom_call.1} parent=1 // pred_check
      _
    $region7: #{tpu_custom_call.1} parent=1 // pred_check_branch
      %19 = sbr.rel (0) target = $region9
    $region8: #{tpu_custom_call.1} parent=1 // pred_region
      _
    $region9: #{tpu_custom_call.1} parent=1 // pred_fallthru
      _
    // Predicated region
    $region10: #{tpu_custom_call.1} parent=1 // pred_check
      _
    $region11: #{tpu_custom_call.1} parent=1 // pred_check_branch
      %21 = sbr.rel (0) target = $region13
    $region12: #{tpu_custom_call.1} parent=1 // pred_region
      _
    $region13: #{tpu_custom_call.1} parent=1 // pred_fallthru
      _
    // Predicated region
    $region14: #{tpu_custom_call.1} parent=1 // pred_check
      _
    $region15: #{tpu_custom_call.1} parent=1 // pred_check_branch
      %23 = sbr.rel (0) target = $region17
    $region16: #{tpu_custom_call.1} parent=1 // pred_region
      _
    $region17: #{tpu_custom_call.1} parent=1 // pred_fallthru
      _
    // Predicated region
    $region18: #{tpu_custom_call.1} parent=1 // pred_check
      _
    $region19: #{tpu_custom_call.1} parent=1 // pred_check_branch
      %25 = sbr.rel (0) target = $region21
    $region20: #{tpu_custom_call.1} parent=1 // pred_region
      _
    $region21: #{tpu_custom_call.1} parent=1 // pred_fallthru
      _
    // Predicated region
    $region22: #{tpu_custom_call.1} parent=1 // pred_check
      _
    $region23: #{tpu_custom_call.1} parent=1 // pred_check_branch
      %27 = sbr.rel (0) target = $region25
    $region24: #{tpu_custom_call.1} parent=1 // pred_region
      %29 = vsyncadd [#allocation3], 0
      %s30 = sshll.u32 %s5, 4
      %s31 = int_to_ptr.hbm [resolvable:$true] %s30
      %s32 = sshll.u32 [#allocation2], 4
      %s33 = int_to_ptr.vmem [resolvable:$true] %s32
      %38 = dma.hbm_to_vmem [thread:$0]  %s31, 2048, %s33, [#allocation3], 128, 128, 8
    $region25: #{tpu_custom_call.1} parent=1 // pred_fallthru
      _
    // Predicated region
    $region26: #{tpu_custom_call.1} parent=1 // pred_check
      _
    $region27: #{tpu_custom_call.1} parent=1 // pred_check_branch
      %40 = sbr.rel (0) target = $region29
    $region28: #{tpu_custom_call.1} parent=1 // pred_region
      _
    $region29: #{tpu_custom_call.1} parent=1 // pred_fallthru
      _
    // Predicated region
    $region30: #{tpu_custom_call.1} parent=1 // pred_check
      _
    $region31: #{tpu_custom_call.1} parent=1 // pred_check_branch
      %42 = sbr.rel (0) target = $region33
    $region32: #{tpu_custom_call.1} parent=1 // pred_region
      _
    $region33: #{tpu_custom_call.1} parent=1 // pred_fallthru
      _
    // Predicated region
    $region34: #{tpu_custom_call.1} parent=1 // pred_check
      _
    $region35: #{tpu_custom_call.1} parent=1 // pred_check_branch
      %44 = sbr.rel (0) target = $region37
    $region36: #{tpu_custom_call.1} parent=1 // pred_region
      _
    $region37: #{tpu_custom_call.1} parent=1 // pred_fallthru
      _
    // Predicated region
    $region38: #{tpu_custom_call.1} parent=1 // pred_check
      _
    $region39: #{tpu_custom_call.1} parent=1 // pred_check_branch
      %46 = sbr.rel (0) target = $region41
    $region40: #{tpu_custom_call.1} parent=1 // pred_region
      %48 = dma.done [#allocation3], 2048
    $region41: #{tpu_custom_call.1} parent=1 // pred_fallthru
      _
    %v49 = vld [vmem:[%s2] sm:$0x1]
    %v50 = vld [vmem:[%s0] sm:$0xff]
    %v51 = vld [vmem:[%s0 + $0x8] sm:$0xff]
    %v52 = vld [vmem:[%s1] sm:$0x1]
    %54 = vset.pattern.permute.xlu0 0
    %55 = vperm.xlu0 %54, %v50
    %v56 = vpop.permute.xlu0 %55
    %59 = vset.pattern.permute.xlu0 0
    %60 = vperm.xlu0 %59, %v51
    %v61 = vpop.permute.xlu0 %60
    %v64 = vperm.slane %v52, 0
    %v66 = vmul.f32 %v56, %v64
    %v67 = vmul.f32 %v61, %v64
    %v69 = vperm.slane %v49, 0
    %v71 = vadd.f32 %v66, %v69
    %v72 = vadd.f32 %v67, %v69
    %v73 = vld [vmem:[%s3] sm:$0x1]
    %v74 = vld [vmem:[%s4] sm:$0x1]
    %75 = vadd.xlane.f32.xlu0 %v71
    %v76 = vpop.xlane.xlu0 %75
    %77 = vadd.xlane.f32.xlu0 %v72
    %v78 = vpop.xlane.xlu0 %77
    %v79 = vrcp.pop 128.0
    %v80 = vmul.f32 128.0, %v79
    %v81 = vsub.f32 1.0, %v80
    %v82 = vmul.f32 %v79, %v81
    %v83 = vadd.f32 %v79, %v82
    %vm84 = vweird.f32 %v79
    %v85 = vsel %vm84, %v79, %v83
    %v86 = vmul.f32 %v76, %v85
    %v87 = vmul.f32 %v78, %v85
    %v88 = vsub.f32 %v71, %v86
    %v89 = vsub.f32 %v72, %v87
    %v90 = vmul.f32 %v88, %v88
    %v91 = vmul.f32 %v89, %v89
    %92 = vadd.xlane.f32.xlu0 %v90
    %v93 = vpop.xlane.xlu0 %92
    %94 = vadd.xlane.f32.xlu0 %v91
    %v95 = vpop.xlane.xlu0 %94
    %v96 = vmul.f32 %v93, %v85
    %v97 = vmul.f32 %v95, %v85
    %v98 = vadd.f32 %v96, 1e-05
    %v99 = vadd.f32 %v97, 1e-05
    %v100 = vrsqrt.pop %v98
    %v101 = vmul.f32 %v100, %v98
    %v102 = vmul.f32 %v101, %v100
    %v103 = vmul.f32 0.5, %v102
    %v104 = vsub.f32 1.5, %v103
    %v105 = vmul.f32 %v100, %v104
    %vm106 = vweird.f32 %v98
    %vm107 = vweird.f32 %v100
    %vm108 = vmor %vm106, %vm107
    %v109 = vsel %vm108, %v100, %v105
    %v110 = vrsqrt.pop %v99
    %v111 = vmul.f32 %v110, %v99
    %v112 = vmul.f32 %v111, %v110
    %v113 = vmul.f32 0.5, %v112
    %v114 = vsub.f32 1.5, %v113
    %v115 = vmul.f32 %v110, %v114
    %vm116 = vweird.f32 %v99
    %vm117 = vweird.f32 %v110
    %vm118 = vmor %vm116, %vm117
    %v119 = vsel %vm118, %v110, %v115
    %v120 = vmul.f32 %v88, %v109
    %v121 = vmul.f32 %v89, %v119
    %v123 = vperm.slane %v73, 0
    %v125 = vmul.f32 %v120, %v123
    %v126 = vmul.f32 %v121, %v123
    %v128 = vperm.slane %v74, 0
    %v130 = vadd.f32 %v125, %v128
    %v131 = vadd.f32 %v126, %v128
    %v132 = vmul.f32 %v130, 0.5
    %v133 = vmul.f32 %v131, 0.5
    %v134 = vmul.f32 %v130, 0.70710677
    %v135 = vmul.f32 %v131, 0.70710677
    %v136 = vmul.f32 %v134, %v134
    %v137 = vmin.f32 16.0, %v136
    %v138 = vmul.f32 %v137, 2.1237322e-06
    %v139 = vadd.f32 %v138, 0.00028619796
    %v140 = vmul.f32 %v137, %v139
    %v141 = vadd.f32 %v140, 0.0036580483
    %v142 = vmul.f32 %v137, %v141
    %v143 = vadd.f32 %v142, 0.05243302
    %v144 = vmul.f32 %v137, %v143
    %v145 = vadd.f32 %v144, 0.18741608
    %v146 = vmul.f32 %v137, %v145
    %v147 = vadd.f32 %v146, 1.1283791
    %v148 = vmul.f32 %v134, %v147
    %v149 = vmul.f32 %v137, 3.8918573e-05
    %v150 = vadd.f32 %v149, 0.001143296
    %v151 = vmul.f32 %v137, %v150
    %v152 = vadd.f32 %v151, 0.014752088
    %v153 = vmul.f32 %v137, %v152
    %v154 = vadd.f32 %v153, 0.112945676
    %v155 = vmul.f32 %v137, %v154
    %v156 = vadd.f32 %v155, 0.4994258
    %v157 = vmul.f32 %v137, %v156
    %v158 = vadd.f32 %v157, 1.0
    %v159 = vrcp.pop %v158
    %v160 = vmul.f32 %v158, %v159
    %v161 = vsub.f32 1.0, %v160
    %v162 = vmul.f32 %v159, %v161
    %v163 = vadd.f32 %v159, %v162
    %vm164 = vweird.f32 %v158
    %vm165 = vweird.f32 %v159
    %vm166 = vmor %vm164, %vm165
    %v167 = vsel %vm166, %v159, %v163
    %v168 = vand.u32 2147483647, %v158
    %vm169 = vcmp.eq.f32.partialorder %v168, 8.507059e+37
    %v170 = vand.u32 %v158, 2147483648
    %v171 = vor.u32 1.1754944e-38, %v170
    %v172 = vsel %vm169, %v171, %v167
    %v173 = vmul.f32 %v148, %v172
    %v174 = vmin.f32 %v173, 1.0
    %v175 = vmax.f32 %v174, -1.0
    %v176 = vmul.f32 %v135, %v135
    %v177 = vmin.f32 16.0, %v176
    %v178 = vmul.f32 %v177, 2.1237322e-06
    %v179 = vadd.f32 %v178, 0.00028619796
    %v180 = vmul.f32 %v177, %v179
    %v181 = vadd.f32 %v180, 0.0036580483
    %v182 = vmul.f32 %v177, %v181
    %v183 = vadd.f32 %v182, 0.05243302
    %v184 = vmul.f32 %v177, %v183
    %v185 = vadd.f32 %v184, 0.18741608
    %v186 = vmul.f32 %v177, %v185
    %v187 = vadd.f32 %v186, 1.1283791
    %v188 = vmul.f32 %v135, %v187
    %v189 = vmul.f32 %v177, 3.8918573e-05
    %v190 = vadd.f32 %v189, 0.001143296
    %v191 = vmul.f32 %v177, %v190
    %v192 = vadd.f32 %v191, 0.014752088
    %v193 = vmul.f32 %v177, %v192
    %v194 = vadd.f32 %v193, 0.112945676
    %v195 = vmul.f32 %v177, %v194
    %v196 = vadd.f32 %v195, 0.4994258
    %v197 = vmul.f32 %v177, %v196
    %v198 = vadd.f32 %v197, 1.0
    %v199 = vrcp.pop %v198
    %v200 = vmul.f32 %v198, %v199
    %v201 = vsub.f32 1.0, %v200
    %v202 = vmul.f32 %v199, %v201
    %v203 = vadd.f32 %v199, %v202
    %vm204 = vweird.f32 %v198
    %vm205 = vweird.f32 %v199
    %vm206 = vmor %vm204, %vm205
    %v207 = vsel %vm206, %v199, %v203
    %v208 = vand.u32 2147483647, %v198
    %vm209 = vcmp.eq.f32.partialorder %v208, 8.507059e+37
    %v210 = vand.u32 %v198, 2147483648
    %v211 = vor.u32 1.1754944e-38, %v210
    %v212 = vsel %vm209, %v211, %v207
    %v213 = vmul.f32 %v188, %v212
    %v214 = vmin.f32 %v213, 1.0
    %v215 = vmax.f32 %v214, -1.0
    %v216 = vadd.f32 %v175, 1.0
    %v217 = vadd.f32 %v215, 1.0
    %v218 = vmul.f32 %v132, %v216
    %v219 = vmul.f32 %v133, %v217
    %v220 = vld [vmem:[#allocation2] sm:$0xff]
    %v221 = vld [vmem:[#allocation2 + $0x8] sm:$0xff]
    %v222 = vld [vmem:[#allocation2 + $0x10] sm:$0xff]
    %v223 = vld [vmem:[#allocation2 + $0x18] sm:$0xff]
    %v224 = vld [vmem:[#allocation2 + $0x20] sm:$0xff]
    %v225 = vld [vmem:[#allocation2 + $0x28] sm:$0xff]
    %v226 = vld [vmem:[#allocation2 + $0x30] sm:$0xff]
    %v227 = vld [vmem:[#allocation2 + $0x38] sm:$0xff]
    %v228 = vld [vmem:[#allocation2 + $0x40] sm:$0xff]
    %v229 = vld [vmem:[#allocation2 + $0x48] sm:$0xff]
    %v230 = vld [vmem:[#allocation2 + $0x50] sm:$0xff]
    %v231 = vld [vmem:[#allocation2 + $0x58] sm:$0xff]
    %v232 = vld [vmem:[#allocation2 + $0x60] sm:$0xff]
    %v233 = vld [vmem:[#allocation2 + $0x68] sm:$0xff]
    %v234 = vld [vmem:[#allocation2 + $0x70] sm:$0xff]
    %v235 = vld [vmem:[#allocation2 + $0x78] sm:$0xff]
    %v236 = vld [vmem:[%s6] sm:$0x1]
    %v238 = vperm.slane %v236, 0
    %240 = vmatpush.msra.mxu0 %v235
    %241 = vmatpush.msra.mxu0 %v234
    %242 = vmatpush.msra.mxu0 %v233
    %243 = vmatpush.msra.mxu0 %v232
    %244 = vmatpush.msra.mxu0 %v231
    %245 = vmatpush.msra.mxu0 %v230
    %246 = vmatpush.msra.mxu0 %v229
    %247 = vmatpush.msra.mxu0 %v228
    %248 = vmatpush.msra.mxu0 %v227
    %249 = vmatpush.msra.mxu0 %v226
    %250 = vmatpush.msra.mxu0 %v225
    %251 = vmatpush.msra.mxu0 %v224
    %252 = vmatpush.msra.mxu0 %v223
    %253 = vmatpush.msra.mxu0 %v222
    %254 = vmatpush.msra.mxu0 %v221
    %255 = vmatpush.msra.mxu0 %v220
    %256 = vmatmul.f32.gmra.mxu0 %v218
    %v257 = vpop.f32.mrf.mxu0
    %v258 = vadd.f32 %v238, %v257
    %259 = vmatmul.f32.gmra.mxu0 %v219
    %v260 = vpop.f32.mrf.mxu0
    %v261 = vadd.f32 %v238, %v260
    %262 = vdwg.mxu0
    %v263 = vld [vmem:[%s7] sm:$0x1]
    %v264 = vld [vmem:[%s8] sm:$0x1]
    %265 = vadd.xlane.f32.xlu0 %v258
    %v266 = vpop.xlane.xlu0 %265
    %267 = vadd.xlane.f32.xlu0 %v261
    %v268 = vpop.xlane.xlu0 %267
    %v269 = vmul.f32 %v266, %v85
    %v270 = vmul.f32 %v268, %v85
    %v271 = vsub.f32 %v258, %v269
    %v272 = vsub.f32 %v261, %v270
    %v273 = vmul.f32 %v271, %v271
    %v274 = vmul.f32 %v272, %v272
    %275 = vadd.xlane.f32.xlu0 %v273
    %v276 = vpop.xlane.xlu0 %275
    %277 = vadd.xlane.f32.xlu0 %v274
    %v278 = vpop.xlane.xlu0 %277
    %v279 = vmul.f32 %v276, %v85
    %v280 = vmul.f32 %v278, %v85
    %v281 = vadd.f32 %v279, 1e-05
    %v282 = vadd.f32 %v280, 1e-05
    %v283 = vrsqrt.pop %v281
    %v284 = vmul.f32 %v283, %v281
    %v285 = vmul.f32 %v284, %v283
    %v286 = vmul.f32 0.5, %v285
    %v287 = vsub.f32 1.5, %v286
    %v288 = vmul.f32 %v283, %v287
    %vm289 = vweird.f32 %v281
    %vm290 = vweird.f32 %v283
    %vm291 = vmor %vm289, %vm290
    %v292 = vsel %vm291, %v283, %v288
    %v293 = vrsqrt.pop %v282
    %v294 = vmul.f32 %v293, %v282
    %v295 = vmul.f32 %v294, %v293
    %v296 = vmul.f32 0.5, %v295
    %v297 = vsub.f32 1.5, %v296
    %v298 = vmul.f32 %v293, %v297
    %vm299 = vweird.f32 %v282
    %vm300 = vweird.f32 %v293
    %vm301 = vmor %vm299, %vm300
    %v302 = vsel %vm301, %v293, %v298
    %v303 = vmul.f32 %v271, %v292
    %v304 = vmul.f32 %v272, %v302
    %v306 = vperm.slane %v263, 0
    %v308 = vmul.f32 %v303, %v306
    %v309 = vmul.f32 %v304, %v306
    %v311 = vperm.slane %v264, 0
    %v313 = vadd.f32 %v308, %v311
    %v314 = vadd.f32 %v309, %v311
    %v315 = vmul.f32 %v313, 0.5
    %v316 = vmul.f32 %v314, 0.5
    %v317 = vmul.f32 %v313, 0.70710677
    %v318 = vmul.f32 %v314, 0.70710677
    %v319 = vmul.f32 %v317, %v317
    %v320 = vmin.f32 16.0, %v319
    %v321 = vmul.f32 %v320, 2.1237322e-06
    %v322 = vadd.f32 %v321, 0.00028619796
    %v323 = vmul.f32 %v320, %v322
    %v324 = vadd.f32 %v323, 0.0036580483
    %v325 = vmul.f32 %v320, %v324
    %v326 = vadd.f32 %v325, 0.05243302
    %v327 = vmul.f32 %v320, %v326
    %v328 = vadd.f32 %v327, 0.18741608
    %v329 = vmul.f32 %v320, %v328
    %v330 = vadd.f32 %v329, 1.1283791
    %v331 = vmul.f32 %v317, %v330
    %v332 = vmul.f32 %v320, 3.8918573e-05
    %v333 = vadd.f32 %v332, 0.001143296
    %v334 = vmul.f32 %v320, %v333
    %v335 = vadd.f32 %v334, 0.014752088
    %v336 = vmul.f32 %v320, %v335
    %v337 = vadd.f32 %v336, 0.112945676
    %v338 = vmul.f32 %v320, %v337
    %v339 = vadd.f32 %v338, 0.4994258
    %v340 = vmul.f32 %v320, %v339
    %v341 = vadd.f32 %v340, 1.0
    %v342 = vrcp.pop %v341
    %v343 = vmul.f32 %v341, %v342
    %v344 = vsub.f32 1.0, %v343
    %v345 = vmul.f32 %v342, %v344
    %v346 = vadd.f32 %v342, %v345
    %vm347 = vweird.f32 %v341
    %vm348 = vweird.f32 %v342
    %vm349 = vmor %vm347, %vm348
    %v350 = vsel %vm349, %v342, %v346
    %v351 = vand.u32 2147483647, %v341
    %vm352 = vcmp.eq.f32.partialorder %v351, 8.507059e+37
    %v353 = vand.u32 %v341, 2147483648
    %v354 = vor.u32 1.1754944e-38, %v353
    %v355 = vsel %vm352, %v354, %v350
    %v356 = vmul.f32 %v331, %v355
    %v357 = vmin.f32 %v356, 1.0
    %v358 = vmax.f32 %v357, -1.0
    %v359 = vmul.f32 %v318, %v318
    %v360 = vmin.f32 16.0, %v359
    %v361 = vmul.f32 %v360, 2.1237322e-06
    %v362 = vadd.f32 %v361, 0.00028619796
    %v363 = vmul.f32 %v360, %v362
    %v364 = vadd.f32 %v363, 0.0036580483
    %v365 = vmul.f32 %v360, %v364
    %v366 = vadd.f32 %v365, 0.05243302
    %v367 = vmul.f32 %v360, %v366
    %v368 = vadd.f32 %v367, 0.18741608
    %v369 = vmul.f32 %v360, %v368
    %v370 = vadd.f32 %v369, 1.1283791
    %v371 = vmul.f32 %v318, %v370
    %v372 = vmul.f32 %v360, 3.8918573e-05
    %v373 = vadd.f32 %v372, 0.001143296
    %v374 = vmul.f32 %v360, %v373
    %v375 = vadd.f32 %v374, 0.014752088
    %v376 = vmul.f32 %v360, %v375
    %v377 = vadd.f32 %v376, 0.112945676
    %v378 = vmul.f32 %v360, %v377
    %v379 = vadd.f32 %v378, 0.4994258
    %v380 = vmul.f32 %v360, %v379
    %v381 = vadd.f32 %v380, 1.0
    %v382 = vrcp.pop %v381
    %v383 = vmul.f32 %v381, %v382
    %v384 = vsub.f32 1.0, %v383
    %v385 = vmul.f32 %v382, %v384
    %v386 = vadd.f32 %v382, %v385
    %vm387 = vweird.f32 %v381
    %vm388 = vweird.f32 %v382
    %vm389 = vmor %vm387, %vm388
    %v390 = vsel %vm389, %v382, %v386
    %v391 = vand.u32 2147483647, %v381
    %vm392 = vcmp.eq.f32.partialorder %v391, 8.507059e+37
    %v393 = vand.u32 %v381, 2147483648
    %v394 = vor.u32 1.1754944e-38, %v393
    %v395 = vsel %vm392, %v394, %v390
    %v396 = vmul.f32 %v371, %v395
    %v397 = vmin.f32 %v396, 1.0
    %v398 = vmax.f32 %v397, -1.0
    %v399 = vadd.f32 %v358, 1.0
    %v400 = vadd.f32 %v398, 1.0
    %v401 = vmul.f32 %v315, %v399
    %v402 = vmul.f32 %v316, %v400
    %403 = vst [vmem:[#allocation5] sm:$0xff] %v401
    %404 = vst [vmem:[#allocation5 + $0x8] sm:$0xff] %v402
    // Predicated region
    $region42: #{tpu_custom_call.1} parent=1 // pred_check
      _
    $region43: #{tpu_custom_call.1} parent=1 // pred_check_branch
      %406 = sbr.rel (0) target = $region45
    $region44: #{tpu_custom_call.1} parent=1 // pred_region
      %408 = vsyncadd [#allocation4], 0
      %s409 = sshll.u32 [#allocation5], 4
      %s410 = int_to_ptr.vmem [resolvable:$true] %s409
      %s411 = sshll.u32 %s9, 4
      %s412 = int_to_ptr.hbm [resolvable:$true] %s411
      %417 = dma.vmem_to_hbm [thread:$0]  %s410, 256, %s412, [#allocation4], 128, 128, 8
    $region45: #{tpu_custom_call.1} parent=1 // pred_fallthru
      _
    // Predicated region
    $region46: #{tpu_custom_call.1} parent=1 // pred_check
      _
    $region47: #{tpu_custom_call.1} parent=1 // pred_check_branch
      %419 = sbr.rel (0) target = $region49
    $region48: #{tpu_custom_call.1} parent=1 // pred_region
      %421 = dma.done [#allocation4], 256
    $region49: #{tpu_custom_call.1} parent=1 // pred_fallthru
      _
    %422 = vsyncpa [#allocation3], 1
    %423 = vsyncpa [#allocation4], 1

</llo_original>
